<compile_context>
chip_gen: v7x
topology: tpu7x:2x2x1
jax: 0.10.0
libtpu: 0.0.40
codegen_flags: <defaults>
</compile_context>

<pallas_src>
import functools

import jax
import jax.numpy as jnp
from jax.experimental import pallas as pl
from jax.experimental.pallas import tpu as pltpu

_LANES = 128        # lane width of a vreg
_MAX_TILE_S = 512   # max sublane rows per tile -> 512*128 pts / channel / step


def _distort_kernel(coef_ref, pts_ref, out_ref, *, eps: float):
    b = pl.program_id(0)
    base = b * 8

    # per-batch distortion coefficients (scalar reads from flat SMEM)
    k1 = coef_ref[base + 0]
    k2 = coef_ref[base + 1]
    p1 = coef_ref[base + 2]
    p2 = coef_ref[base + 3]
    k3 = coef_ref[base + 4]
    k4 = coef_ref[base + 5]
    k5 = coef_ref[base + 6]
    k6 = coef_ref[base + 7]

    # (TILE_S, 128) sublane/lane-dense channel planes
    x0 = pts_ref[0, 0, :, :]
    y0 = pts_ref[0, 1, :, :]
    z = pts_ref[0, 2, :, :]

    inv = 1.0 / (z + eps)   # single divide shared by x and y
    x = x0 * inv
    y = y0 * inv

    x_sq = x * x
    y_sq = y * y
    xy = x * y
    r_sq = x_sq + x_sq      # reproduces reference exactly (NOT x_sq + y_sq)

    c1 = 1.0 + r_sq * (k1 + r_sq * (k2 + r_sq * k3))
    c2 = 1.0 + r_sq * (k4 + r_sq * (k5 + r_sq * k6))
    c = c1 / c2             # kept exact to preserve 1e-5 parity

    x_d = c * x + p1 * 2.0 * xy + p2 * (r_sq + 2.0 * x_sq)
    y_d = c * y + p2 * 2.0 * xy + p1 * (r_sq + 2.0 * y_sq)

    out_ref[0, 0, :, :] = x_d * z
    out_ref[0, 1, :, :] = y_d * z
    out_ref[0, 2, :, :] = z


def _pad_coefficients(coefficients: jax.Array) -> jax.Array:
    rem = 8 - coefficients.shape[-1]
    if rem:
        coefficients = jnp.concatenate(
            [coefficients, jnp.zeros_like(coefficients[..., :rem])], axis=-1
        )
    return coefficients


def distort_channel_first(
    points_cf: jax.Array, coefficients: jax.Array, eps: float = 1e-8
) -> jax.Array:
    """points_cf: [B, 3, N], coefficients: [B, C<=8] -> [B, 3, N].

    Preferred (transpose-free) entry point for channel-first pipelines.
    """
    B, ch, N = points_cf.shape
    assert ch == 3, "expected channel-first [B, 3, N] points"
    coef_flat = _pad_coefficients(coefficients).reshape(-1)  # [B*8] flat SMEM

    # Lane/sublane-dense tiling of the point axis.
    s_raw = -(-N // _LANES)                 # rows of 128 lanes
    n_tiles = -(-s_raw // _MAX_TILE_S)      # grid extent along the S axis
    tile_s = -(-s_raw // n_tiles)
    tile_s = -(-tile_s // 8) * 8            # sublane multiple of 8
    S = n_tiles * tile_s
    n_pad = S * _LANES

    if n_pad != N:
        # Zero padding is numerically safe: z=0 -> denom=eps, x=y=0, all finite.
        points_cf = jnp.pad(points_cf, ((0, 0), (0, 0), (0, n_pad - N)))
    pts = points_cf.reshape(B, 3, S, _LANES)

    out = pl.pallas_call(
        functools.partial(_distort_kernel, eps=eps),
        out_shape=jax.ShapeDtypeStruct((B, 3, S, _LANES), points_cf.dtype),
        grid=(B, n_tiles),
        in_specs=[
            pl.BlockSpec(memory_space=pltpu.SMEM),                # coeffs (flat)
            pl.BlockSpec((1, 3, tile_s, _LANES), lambda b, s: (b, 0, s, 0)),
        ],
        out_specs=pl.BlockSpec((1, 3, tile_s, _LANES), lambda b, s: (b, 0, s, 0)),
        compiler_params=pltpu.CompilerParams(
            dimension_semantics=("parallel", "parallel"),
        ),
    )(coef_flat, pts)

    out = out.reshape(B, 3, n_pad)
    if n_pad != N:
        out = out[:, :, :N]
    return out


def distort(points: jax.Array, coefficients: jax.Array, eps: float = 1e-8) -> jax.Array:
    """PyTorch-layout wrapper: points [B, N, 3] -> [B, N, 3].

    The two transposes are pure layout glue for parity with the torch module;
    memory-bound callers should use `distort_channel_first` to avoid them.
    """
    pts_cf = jnp.transpose(points, (0, 2, 1))          # [B, 3, N]
    out_cf = distort_channel_first(pts_cf, coefficients, eps=eps)
    return jnp.transpose(out_cf, (0, 2, 1))            # back to [B, N, 3]


def _distort_ref(points, coefficients, eps=1e-8):
    """Pure-JAX reference mirroring the PyTorch module line by line."""
    coefficients = _pad_coefficients(coefficients)
    k1 = coefficients[..., 0][:, None, None]
    k2 = coefficients[..., 1][:, None, None]
    p1 = coefficients[..., 2][:, None, None]
    p2 = coefficients[..., 3][:, None, None]
    k3 = coefficients[..., 4][:, None, None]
    k4 = coefficients[..., 5][:, None, None]
    k5 = coefficients[..., 6][:, None, None]
    k6 = coefficients[..., 7][:, None, None]
    xy_ = points[..., :2] / (points[..., 2:] + eps)
    x = xy_[..., 0:1]
    y = xy_[..., 1:2]
    x_sq = x ** 2
    y_sq = y ** 2
    xy = x * y
    r_sq = x_sq + x_sq
    c1 = 1 + r_sq * (k1 + r_sq * (k2 + r_sq * k3))
    c2 = 1 + r_sq * (k4 + r_sq * (k5 + r_sq * k6))
    c = c1 / c2
    x_d = c * x + p1 * 2.0 * xy + p2 * (r_sq + 2 * x_sq)
    y_d = c * y + p2 * 2.0 * xy + p1 * (r_sq + 2 * y_sq)
    z_d = points[..., 2:3]
    return jnp.concatenate([x_d * z_d, y_d * z_d, z_d], axis=-1)


if __name__ == "__main__":
    key = jax.random.PRNGKey(0)
    kp, kc, kz = jax.random.split(key, 3)

    B, N = 2, 1000  # non-multiple of 128 -> exercises the zero-padding path
    xy = jax.random.normal(kp, (B, N, 2), dtype=jnp.float32)
    z = jax.random.uniform(kz, (B, N, 1), minval=0.5, maxval=3.0, dtype=jnp.float32)
    points = jnp.concatenate([xy, z], axis=-1)                         # [B, N, 3]
    coefficients = 0.05 * jax.random.normal(kc, (B, 4), jnp.float32)   # padded to 8

    out = distort(points, coefficients)
    jax.block_until_ready(out)
    ref = _distort_ref(points, coefficients)
    assert out.shape == (B, N, 3)
    assert jnp.allclose(out, ref, atol=1e-5, rtol=1e-5), "mismatch vs reference"

    # channel-first (transpose-free) path
    out_cf = distort_channel_first(jnp.transpose(points, (0, 2, 1)), coefficients)
    jax.block_until_ready(out_cf)
    assert jnp.allclose(
        jnp.transpose(out_cf, (0, 2, 1)), ref, atol=1e-5, rtol=1e-5
    ), "channel-first mismatch vs reference"

    print("KERNEL_OK")
</pallas_src>

<mosaic_0001>
module attributes {stable_mosaic.version = 11 : i64} {
  func.func @_distort_kernel(%arg0: i32, %arg1: i32, %arg2: memref<16xf32, #tpu.memory_space<smem>>, %arg3: memref<1x3x8x128xf32, #tpu.memory_space<vmem>>, %arg4: memref<1x3x8x128xf32, #tpu.memory_space<vmem>>) attributes {dimension_semantics = [#tpu.dimension_semantics<parallel>, #tpu.dimension_semantics<parallel>], iteration_bounds = array<i64: 2, 1>, scalar_prefetch = 0 : i64, scratch_operands = 0 : i64, tpu.core_type = #tpu.core_type<tc>, window_params = [{transform_indices = @transform_0, window_bounds = array<i64: 16>}, {transform_indices = @transform_1, window_bounds = array<i64: 1, 3, 8, 128>}, {transform_indices = @transform_2, window_bounds = array<i64: 1, 3, 8, 128>}]} {
    %c8_i32 = arith.constant 8 : i32
    %0 = arith.muli %arg0, %c8_i32 : i32
    %c0_i32 = arith.constant 0 : i32
    %1 = arith.addi %0, %c0_i32 : i32
    %2 = arith.index_cast %1 : i32 to index
    %3 = memref.load %arg2[%2] : memref<16xf32, #tpu.memory_space<smem>>
    %c1_i32 = arith.constant 1 : i32
    %4 = arith.addi %0, %c1_i32 : i32
    %5 = arith.index_cast %4 : i32 to index
    %6 = memref.load %arg2[%5] : memref<16xf32, #tpu.memory_space<smem>>
    %c2_i32 = arith.constant 2 : i32
    %7 = arith.addi %0, %c2_i32 : i32
    %8 = arith.index_cast %7 : i32 to index
    %9 = memref.load %arg2[%8] : memref<16xf32, #tpu.memory_space<smem>>
    %c3_i32 = arith.constant 3 : i32
    %10 = arith.addi %0, %c3_i32 : i32
    %11 = arith.index_cast %10 : i32 to index
    %12 = memref.load %arg2[%11] : memref<16xf32, #tpu.memory_space<smem>>
    %c4_i32 = arith.constant 4 : i32
    %13 = arith.addi %0, %c4_i32 : i32
    %14 = arith.index_cast %13 : i32 to index
    %15 = memref.load %arg2[%14] : memref<16xf32, #tpu.memory_space<smem>>
    %c5_i32 = arith.constant 5 : i32
    %16 = arith.addi %0, %c5_i32 : i32
    %17 = arith.index_cast %16 : i32 to index
    %18 = memref.load %arg2[%17] : memref<16xf32, #tpu.memory_space<smem>>
    %c6_i32 = arith.constant 6 : i32
    %19 = arith.addi %0, %c6_i32 : i32
    %20 = arith.index_cast %19 : i32 to index
    %21 = memref.load %arg2[%20] : memref<16xf32, #tpu.memory_space<smem>>
    %c7_i32 = arith.constant 7 : i32
    %22 = arith.addi %0, %c7_i32 : i32
    %23 = arith.index_cast %22 : i32 to index
    %24 = memref.load %arg2[%23] : memref<16xf32, #tpu.memory_space<smem>>
    %c0 = arith.constant 0 : index
    %c0_0 = arith.constant 0 : index
    %c0_1 = arith.constant 0 : index
    %c0_2 = arith.constant 0 : index
    %25 = vector.load %arg3[%c0, %c0_0, %c0_1, %c0_2] : memref<1x3x8x128xf32, #tpu.memory_space<vmem>>, vector<1x1x8x128xf32>
    %26 = vector.shape_cast %25 : vector<1x1x8x128xf32> to vector<8x128xf32>
    %c0_3 = arith.constant 0 : index
    %c1 = arith.constant 1 : index
    %c0_4 = arith.constant 0 : index
    %c0_5 = arith.constant 0 : index
    %27 = vector.load %arg3[%c0_3, %c1, %c0_4, %c0_5] : memref<1x3x8x128xf32, #tpu.memory_space<vmem>>, vector<1x1x8x128xf32>
    %28 = vector.shape_cast %27 : vector<1x1x8x128xf32> to vector<8x128xf32>
    %c0_6 = arith.constant 0 : index
    %c2 = arith.constant 2 : index
    %c0_7 = arith.constant 0 : index
    %c0_8 = arith.constant 0 : index
    %29 = vector.load %arg3[%c0_6, %c2, %c0_7, %c0_8] : memref<1x3x8x128xf32, #tpu.memory_space<vmem>>, vector<1x1x8x128xf32>
    %30 = vector.shape_cast %29 : vector<1x1x8x128xf32> to vector<8x128xf32>
    %cst = arith.constant 9.99999993E-9 : f32
    %31 = vector.broadcast %cst : f32 to vector<8x128xf32>
    %32 = arith.addf %30, %31 : vector<8x128xf32>
    %cst_9 = arith.constant 1.000000e+00 : f32
    %33 = vector.broadcast %cst_9 : f32 to vector<8x128xf32>
    %34 = arith.divf %33, %32 : vector<8x128xf32>
    %35 = arith.mulf %26, %34 : vector<8x128xf32>
    %36 = arith.mulf %28, %34 : vector<8x128xf32>
    %37 = arith.mulf %35, %35 : vector<8x128xf32>
    %38 = arith.mulf %36, %36 : vector<8x128xf32>
    %39 = arith.mulf %35, %36 : vector<8x128xf32>
    %40 = arith.addf %37, %37 : vector<8x128xf32>
    %41 = vector.broadcast %15 : f32 to vector<8x128xf32>
    %42 = arith.mulf %40, %41 : vector<8x128xf32>
    %43 = vector.broadcast %6 : f32 to vector<8x128xf32>
    %44 = arith.addf %43, %42 : vector<8x128xf32>
    %45 = arith.mulf %40, %44 : vector<8x128xf32>
    %46 = vector.broadcast %3 : f32 to vector<8x128xf32>
    %47 = arith.addf %46, %45 : vector<8x128xf32>
    %48 = arith.mulf %40, %47 : vector<8x128xf32>
    %cst_10 = arith.constant 1.000000e+00 : f32
    %49 = vector.broadcast %cst_10 : f32 to vector<8x128xf32>
    %50 = arith.addf %49, %48 : vector<8x128xf32>
    %51 = vector.broadcast %24 : f32 to vector<8x128xf32>
    %52 = arith.mulf %40, %51 : vector<8x128xf32>
    %53 = vector.broadcast %21 : f32 to vector<8x128xf32>
    %54 = arith.addf %53, %52 : vector<8x128xf32>
    %55 = arith.mulf %40, %54 : vector<8x128xf32>
    %56 = vector.broadcast %18 : f32 to vector<8x128xf32>
    %57 = arith.addf %56, %55 : vector<8x128xf32>
    %58 = arith.mulf %40, %57 : vector<8x128xf32>
    %cst_11 = arith.constant 1.000000e+00 : f32
    %59 = vector.broadcast %cst_11 : f32 to vector<8x128xf32>
    %60 = arith.addf %59, %58 : vector<8x128xf32>
    %61 = arith.divf %50, %60 : vector<8x128xf32>
    %62 = arith.mulf %61, %35 : vector<8x128xf32>
    %cst_12 = arith.constant 2.000000e+00 : f32
    %63 = arith.mulf %9, %cst_12 : f32
    %64 = vector.broadcast %63 : f32 to vector<8x128xf32>
    %65 = arith.mulf %64, %39 : vector<8x128xf32>
    %66 = arith.addf %62, %65 : vector<8x128xf32>
    %cst_13 = arith.constant 2.000000e+00 : f32
    %67 = vector.broadcast %cst_13 : f32 to vector<8x128xf32>
    %68 = arith.mulf %67, %37 : vector<8x128xf32>
    %69 = arith.addf %40, %68 : vector<8x128xf32>
    %70 = vector.broadcast %12 : f32 to vector<8x128xf32>
    %71 = arith.mulf %70, %69 : vector<8x128xf32>
    %72 = arith.addf %66, %71 : vector<8x128xf32>
    %73 = arith.mulf %61, %36 : vector<8x128xf32>
    %cst_14 = arith.constant 2.000000e+00 : f32
    %74 = arith.mulf %12, %cst_14 : f32
    %75 = vector.broadcast %74 : f32 to vector<8x128xf32>
    %76 = arith.mulf %75, %39 : vector<8x128xf32>
    %77 = arith.addf %73, %76 : vector<8x128xf32>
    %cst_15 = arith.constant 2.000000e+00 : f32
    %78 = vector.broadcast %cst_15 : f32 to vector<8x128xf32>
    %79 = arith.mulf %78, %38 : vector<8x128xf32>
    %80 = arith.addf %40, %79 : vector<8x128xf32>
    %81 = vector.broadcast %9 : f32 to vector<8x128xf32>
    %82 = arith.mulf %81, %80 : vector<8x128xf32>
    %83 = arith.addf %77, %82 : vector<8x128xf32>
    %84 = arith.mulf %72, %30 : vector<8x128xf32>
    %c0_16 = arith.constant 0 : index
    %c0_17 = arith.constant 0 : index
    %c0_18 = arith.constant 0 : index
    %c0_19 = arith.constant 0 : index
    %85 = vector.load %arg4[%c0_16, %c0_17, %c0_18, %c0_19] : memref<1x3x8x128xf32, #tpu.memory_space<vmem>>, vector<1x1x8x128xf32>
    %86 = vector.shape_cast %85 : vector<1x1x8x128xf32> to vector<8x128xf32>
    %87 = vector.shape_cast %84 : vector<8x128xf32> to vector<1x1x8x128xf32>
    tpu.vector_store %arg4[%c0_16, %c0_17, %c0_18, %c0_19], %87 {strides = array<i32>} : memref<1x3x8x128xf32, #tpu.memory_space<vmem>>, vector<1x1x8x128xf32>,
    %88 = arith.mulf %83, %30 : vector<8x128xf32>
    %c0_20 = arith.constant 0 : index
    %c1_21 = arith.constant 1 : index
    %c0_22 = arith.constant 0 : index
    %c0_23 = arith.constant 0 : index
    %89 = vector.load %arg4[%c0_20, %c1_21, %c0_22, %c0_23] : memref<1x3x8x128xf32, #tpu.memory_space<vmem>>, vector<1x1x8x128xf32>
    %90 = vector.shape_cast %89 : vector<1x1x8x128xf32> to vector<8x128xf32>
    %91 = vector.shape_cast %88 : vector<8x128xf32> to vector<1x1x8x128xf32>
    tpu.vector_store %arg4[%c0_20, %c1_21, %c0_22, %c0_23], %91 {strides = array<i32>} : memref<1x3x8x128xf32, #tpu.memory_space<vmem>>, vector<1x1x8x128xf32>,
    %c0_24 = arith.constant 0 : index
    %c2_25 = arith.constant 2 : index
    %c0_26 = arith.constant 0 : index
    %c0_27 = arith.constant 0 : index
    %92 = vector.load %arg4[%c0_24, %c2_25, %c0_26, %c0_27] : memref<1x3x8x128xf32, #tpu.memory_space<vmem>>, vector<1x1x8x128xf32>
    %93 = vector.shape_cast %92 : vector<1x1x8x128xf32> to vector<8x128xf32>
    %94 = vector.shape_cast %30 : vector<8x128xf32> to vector<1x1x8x128xf32>
    tpu.vector_store %arg4[%c0_24, %c2_25, %c0_26, %c0_27], %94 {strides = array<i32>} : memref<1x3x8x128xf32, #tpu.memory_space<vmem>>, vector<1x1x8x128xf32>,
    return
  }
  func.func @transform_0(%arg0: i32, %arg1: i32) -> i32 {
    %c0_i32 = arith.constant 0 : i32
    %c0_i32_0 = arith.constant 0 : i32
    return %c0_i32 : i32
  }
  func.func @transform_1(%arg0: i32, %arg1: i32) -> (i32, i32, i32, i32) {
    %c0_i32 = arith.constant 0 : i32
    %c0_i32_0 = arith.constant 0 : i32
    %c0_i32_1 = arith.constant 0 : i32
    return %arg0, %c0_i32, %arg1, %c0_i32_0 : i32, i32, i32, i32
  }
  func.func @transform_2(%arg0: i32, %arg1: i32) -> (i32, i32, i32, i32) {
    %c0_i32 = arith.constant 0 : i32
    %c0_i32_0 = arith.constant 0 : i32
    %c0_i32_1 = arith.constant 0 : i32
    return %arg0, %c0_i32, %arg1, %c0_i32_0 : i32, i32, i32, i32
  }
}

</mosaic_0001>

<llo_original>
// kernel: tpu_custom_call.1
$region0: #{tpu_custom_call.1}
  #allocation0 [shape = 'u32[]', space=smem, size = 0x4, offset = 0x4, fixed_abs, tag = 'smem constant byte address 0x4 - core index']
  #allocation1 [shape = 'u32[144,128]{1,0:T(1,128)}', space=vmem, size = 0x12000, scoped, tag = 'internal scratch']
  %s0 = inlined_call_operand.hbm [shape: f32[16], index: 0, kind: input, shape index: {}]
  %s1 = inlined_call_operand.hbm [shape: f32[2,3,8,128], index: 1, kind: input, shape index: {}]
  %s2 = inlined_call_operand.hbm [shape: f32[2,3,8,128], index: 2, kind: output, shape index: {}]
  %s3 = sld [smem:[#allocation0]]
  $region49: #{tpu_custom_call.1} parent=0
    _
  %s5 = ssub.s32 1, %s3
  %s6 = scalar_select 0, %s5, %s3
  $region1: #{tpu_custom_call.1} parent=0
    #allocation2 [shape = 'u8[512]{0}', space=smem, size = 0x200, scoped, tag = 'input window, operand 0, single buffered']
    #allocation3 [shape = 's32[2]{0}', space=sflag, size = 0x8, scoped, tag = 'scoped memory for tpu_custom_call.1']
    #allocation4 [shape = 's32[2]{0}', space=sflag, size = 0x8, scoped, tag = 'scoped memory for tpu_custom_call.1']
    #allocation5 [shape = 's32[2]{0}', space=sflag, size = 0x8, scoped, tag = 'scoped memory for tpu_custom_call.1']
    #allocation6 [shape = 'u8[24576]{0}', space=vmem, size = 0x6000, scoped, tag = 'input window, operand 1']
    #allocation7 [shape = 'u8[24576]{0}', space=vmem, size = 0x6000, scoped, tag = 'output window, operand 0']
    %7 = vsyncpa [#allocation5], 0
    %8 = vsyncpa [#allocation3], 0
    %s9 = scalar_lea.sflag [#allocation3], 1
    %10 = vsyncpa %s9, 0
    %11 = vsyncpa [#allocation4], 0
    %s12 = scalar_lea.sflag [#allocation4], 1
    %13 = vsyncpa %s12, 0
    loop: start=0, step=1, limit=4
    $region2: #{tpu_custom_call.1} parent=1 // loop_pre_header
      _
    $region3: #{tpu_custom_call.1} parent=1 // loop_header
      %s15 = sphi 0, %s19
      %p16 = scmp.ge.s32.totalorder %s15, 4
      %s22 = sphi 0, %s34
      %s23 = sphi 0, %s30
      %s24 = sphi 0, %s22
      %s25 = sphi 0, %s23
      %s26 = sphi 0, %s24
      %s27 = sphi 0, %s25
      %s35 = sphi 0, %s35
      %s37 = sphi 0, %s35
      %s38 = sphi 0, %s37
      %s52 = sphi 0, %s38
      %s60 = sphi 0, %s62
      %s63 = sphi 0, %s60
      %s64 = sphi 0, %s63
      %s80 = sphi 0, %s64
      %s88 = sphi 0, %s90
      %s91 = sphi 0, %s88
      %s92 = sphi 0, %s91
      %s108 = sphi 0, %s92
    $region4: #{tpu_custom_call.1} parent=1 // loop_header_branch
      %18 = sbr.rel (%p16) target = $region8
    $region5: #{tpu_custom_call.1} parent=1 // loop_body
      %s20 = ssub.s32 %s15, 1
      %s21 = ssub.s32 %s15, 2
      %s28 = sadd.s32 1, %s23
      %p29 = scmp.ge.s32.totalorder %s28, 1
      %s30 = scalar_select %p29, 0, %s28
      %s31 = sadd.s32 1, %s22
      %s32 = scalar_select %p29, %s31, %s22
      %p33 = scmp.ge.s32.totalorder %s32, 2
      %s34 = scalar_select %p33, 0, %s32
      %s36 = sadd.s32 %s35, 1
      %p39 = scmp.eq.s32.totalorder %s15, 1
      %p40 = scmp.ne.s32.totalorder %s35, %s37
      %p41 = scmp.eq.s32.totalorder %s15, 0
      %p42 = por %p40, %p41
      %p43 = scmp.ne.s32.totalorder %s35, %s37
      %p44 = scmp.eq.s32.totalorder %s20, 1
      %p45 = por %p43, %p44
      %p46 = scmp.ne.s32.totalorder %s37, %s38
      %p47 = scmp.eq.s32.totalorder %s20, 0
      %p48 = por %p46, %p47
      %p49 = scmp.ne.s32.totalorder %s37, %s38
      %p50 = scmp.eq.s32.totalorder %s21, 1
      %p51 = por %p49, %p50
      %p53 = scmp.ne.s32.totalorder %s38, %s52
      %p54 = scmp.eq.s32.totalorder %s21, 0
      %p55 = por %p53, %p54
      %s56 = ssub.s32 %s22, %s34
      %s57 = ssub.s32 %s23, %s30
      %s58 = sor.u32 %s56, %s57
      %p59 = scmp.eq.s32.totalorder %s58, 0
      %s61 = sadd.s32 %s60, 1
      %s62 = scalar_select %p59, %s60, %s61
      %p65 = pneg %p59
      %p66 = scmp.eq.s32.totalorder %s15, 1
      %p67 = por %p65, %p66
      %p68 = scmp.ne.s32.totalorder %s60, %s63
      %p69 = scmp.eq.s32.totalorder %s15, 0
      %p70 = por %p68, %p69
      %p71 = scmp.ne.s32.totalorder %s60, %s63
      %p72 = scmp.eq.s32.totalorder %s20, 1
      %p73 = por %p71, %p72
      %p74 = scmp.ne.s32.totalorder %s63, %s64
      %p75 = scmp.eq.s32.totalorder %s20, 0
      %p76 = por %p74, %p75
      %p77 = scmp.ne.s32.totalorder %s63, %s64
      %p78 = scmp.eq.s32.totalorder %s21, 1
      %p79 = por %p77, %p78
      %p81 = scmp.ne.s32.totalorder %s64, %s80
      %p82 = scmp.eq.s32.totalorder %s21, 0
      %p83 = por %p81, %p82
      %s84 = ssub.s32 %s22, %s34
      %s85 = ssub.s32 %s23, %s30
      %s86 = sor.u32 %s84, %s85
      %p87 = scmp.eq.s32.totalorder %s86, 0
      %s89 = sadd.s32 %s88, 1
      %s90 = scalar_select %p87, %s88, %s89
      %p93 = pneg %p87
      %p94 = scmp.eq.s32.totalorder %s15, 1
      %p95 = por %p93, %p94
      %p96 = scmp.ne.s32.totalorder %s88, %s91
      %p97 = scmp.eq.s32.totalorder %s15, 0
      %p98 = por %p96, %p97
      %p99 = scmp.ne.s32.totalorder %s88, %s91
      %p100 = scmp.eq.s32.totalorder %s20, 1
      %p101 = por %p99, %p100
      %p102 = scmp.ne.s32.totalorder %s91, %s92
      %p103 = scmp.eq.s32.totalorder %s20, 0
      %p104 = por %p102, %p103
      %p105 = scmp.ne.s32.totalorder %s91, %s92
      %p106 = scmp.eq.s32.totalorder %s21, 1
      %p107 = por %p105, %p106
      %p109 = scmp.ne.s32.totalorder %s92, %s108
      %p110 = scmp.eq.s32.totalorder %s21, 0
      %p111 = por %p109, %p110
      %p112 = scmp.le.s32.totalorder 1, %s15
      %p113 = scmp.lt.s32.totalorder %s15, 3
      %p114 = pnand %p112, %p113
      %p115 = pneg %p114
      // Predicated region
      $region9: #{tpu_custom_call.1} parent=5 // pred_check
        _
      $region10: #{tpu_custom_call.1} parent=5 // pred_check_branch
        %117 = sbr.rel (%p114) target = $region12
      $region11: #{tpu_custom_call.1} parent=5 // pred_region
        %s118 = ssub.s32 %s15, 1
        // Predicated region
        $region13: #{tpu_custom_call.1} parent=11 // pred_check
          %p119 = pneg %p48
        $region14: #{tpu_custom_call.1} parent=11 // pred_check_branch
          %121 = sbr.rel (%p119) target = $region16
        $region15: #{tpu_custom_call.1} parent=11 // pred_region
          %s123 = ssub.s32 16, 16
          %124 = vsyncadd [#allocation5], %s123
          %127 = dma.hbm_to_smem %s0, 16, [#allocation2], [#allocation5]
        $region16: #{tpu_custom_call.1} parent=11 // pred_fallthru
          _
      $region12: #{tpu_custom_call.1} parent=5 // pred_fallthru
        _
      %p128 = scmp.lt.s32.totalorder %s15, 2
      // Predicated region
      $region17: #{tpu_custom_call.1} parent=5 // pred_check
        %p129 = pneg %p128
      $region18: #{tpu_custom_call.1} parent=5 // pred_check_branch
        %131 = sbr.rel (%p129) target = $region20
      $region19: #{tpu_custom_call.1} parent=5 // pred_region
        // Predicated region
        $region21: #{tpu_custom_call.1} parent=19 // pred_check
          %p132 = pneg %p70
        $region22: #{tpu_custom_call.1} parent=19 // pred_check_branch
          %134 = sbr.rel (%p132) target = $region24
        $region23: #{tpu_custom_call.1} parent=19 // pred_region
          %s135 = sand.u32 %s60, 1
          %s136 = scalar_lea.sflag [#allocation3], %s135
          %s137 = sand.u32 %s60, 1
          %s138 = smul.addr %s137, 24
          %s139 = scalar_lea.vmem [#allocation6], %s138
          %s141 = ssub.s32 384, 384
          %142 = vsyncadd %s136, %s141
          %s143 = smul.addr %s22, 3
          %s144 = sadd.s32 %s23, %s143
          %s145 = smul.addr %s144, 128
          %s146 = scalar_lea.hbm %s1, %s145
          %s147 = sshll.u32 %s139, 4
          %s148 = int_to_ptr.vmem [resolvable:$true] %s147
          %153 = dma.hbm_to_vmem [thread:$0]  %s146, 384, %s148, %s136, 128, 128, 8
        $region24: #{tpu_custom_call.1} parent=19 // pred_fallthru
          _
      $region20: #{tpu_custom_call.1} parent=5 // pred_fallthru
        _
      %p154 = scmp.le.s32.totalorder 1, %s15
      %p155 = scmp.lt.s32.totalorder %s15, 3
      %p156 = pnand %p154, %p155
      %p157 = pneg %p156
      // Predicated region
      $region25: #{tpu_custom_call.1} parent=5 // pred_check
        _
      $region26: #{tpu_custom_call.1} parent=5 // pred_check_branch
        %159 = sbr.rel (%p156) target = $region28
      $region27: #{tpu_custom_call.1} parent=5 // pred_region
        %s160 = ssub.s32 %s15, 1
        // Predicated region
        $region29: #{tpu_custom_call.1} parent=27 // pred_check
          %p161 = pneg %p48
        $region30: #{tpu_custom_call.1} parent=27 // pred_check_branch
          %163 = sbr.rel (%p161) target = $region32
        $region31: #{tpu_custom_call.1} parent=27 // pred_region
          %164 = dma.done [#allocation5], 16
        $region32: #{tpu_custom_call.1} parent=27 // pred_fallthru
          _
        %s165 = sand.u32 %s63, 1
        %s166 = scalar_lea.sflag [#allocation3], %s165
        %s167 = sand.u32 %s63, 1
        %s168 = smul.addr %s167, 24
        %s169 = scalar_lea.vmem [#allocation6], %s168
        // Predicated region
        $region33: #{tpu_custom_call.1} parent=27 // pred_check
          %p170 = pneg %p76
        $region34: #{tpu_custom_call.1} parent=27 // pred_check_branch
          %172 = sbr.rel (%p170) target = $region36
        $region35: #{tpu_custom_call.1} parent=27 // pred_region
          %173 = dma.done %s166, 384
        $region36: #{tpu_custom_call.1} parent=27 // pred_fallthru
          _
        %174 = sfence
        %p175 = pneg %p48
        %p176 = pneg %p45
        %s177 = sand.u32 %s63, 1
        %s178 = scalar_lea.sflag [#allocation3], %s177
        %s179 = sand.u32 %s63, 1
        %s180 = smul.addr %s179, 24
        %s181 = scalar_lea.vmem [#allocation6], %s180
        %p182 = pneg %p76
        %p183 = pneg %p73
        %p184 = pneg %p104
        %p185 = pneg %p101
        %s186 = sand.u32 %s91, 1
        %s187 = scalar_lea.sflag [#allocation4], %s186
        %s188 = sand.u32 %s91, 1
        %s189 = smul.addr %s188, 24
        %s190 = scalar_lea.vmem [#allocation7], %s189
        %s191 = smul.u32 %s24, 8
        %s192 = sld [smem:[#allocation2 + %s191]]
        %s193 = sadd.s32 %s191, 1
        %s194 = sld [smem:[#allocation2 + %s193]]
        %s195 = sadd.s32 %s191, 2
        %s196 = sld [smem:[#allocation2 + %s195]]
        %s197 = sadd.s32 %s191, 3
        %s198 = sld [smem:[#allocation2 + %s197]]
        %s199 = sadd.s32 %s191, 4
        %s200 = sld [smem:[#allocation2 + %s199]]
        %s201 = sadd.s32 %s191, 5
        %s202 = sld [smem:[#allocation2 + %s201]]
        %s203 = sadd.s32 %s191, 6
        %s204 = sld [smem:[#allocation2 + %s203]]
        %s205 = sadd.s32 %s191, 7
        %s206 = sld [smem:[#allocation2 + %s205]]
        %v207 = vld [vmem:[%s169] sm:$0xff]
        %s208 = scalar_lea.vmem %s169, 8 [#allocation6]
        %v209 = vld [vmem:[%s208] sm:$0xff]
        %s210 = scalar_lea.vmem %s169, 16 [#allocation6]
        %v211 = vld [vmem:[%s210] sm:$0xff]
        %v212 = vadd.f32 %v211, 1e-08
        %v213 = vrcp.pop %v212
        %v214 = vmul.f32 1.0, %v213
        %v215 = vmul.f32 %v207, %v214
        %v216 = vmul.f32 %v209, %v214
        %v217 = vmul.f32 %v215, %v215
        %v218 = vmul.f32 %v216, %v216
        %v219 = vmul.f32 %v215, %v216
        %v220 = vadd.f32 %v217, %v217
        %v221 = vstv %s200
        %v222 = vmul.f32 %v220, %v221
        %v223 = vstv %s194
        %v224 = vadd.f32 %v223, %v222
        %v225 = vmul.f32 %v220, %v224
        %v226 = vstv %s192
        %v227 = vadd.f32 %v226, %v225
        %v228 = vmul.f32 %v220, %v227
        %v229 = vadd.f32 %v228, 1.0
        %v230 = vstv %s206
        %v231 = vmul.f32 %v220, %v230
        %v232 = vstv %s204
        %v233 = vadd.f32 %v232, %v231
        %v234 = vmul.f32 %v220, %v233
        %v235 = vstv %s202
        %v236 = vadd.f32 %v235, %v234
        %v237 = vmul.f32 %v220, %v236
        %v238 = vadd.f32 %v237, 1.0
        %v239 = vrcp.pop %v238
        %v240 = vmul.f32 %v229, %v239
        %v241 = vmul.f32 %v240, %v215
        %s242 = smul.f32 %s196, 2.0
        %v243 = vstv %s242
        %v244 = vmul.f32 %v243, %v219
        %v245 = vadd.f32 %v241, %v244
        %v246 = vmul.f32 %v217, 2.0
        %v247 = vadd.f32 %v220, %v246
        %v248 = vstv %s198
        %v249 = vmul.f32 %v248, %v247
        %v250 = vadd.f32 %v245, %v249
        %v251 = vmul.f32 %v240, %v216
        %s252 = smul.f32 %s198, 2.0
        %v253 = vstv %s252
        %v254 = vmul.f32 %v253, %v219
        %v255 = vadd.f32 %v251, %v254
        %v256 = vmul.f32 %v218, 2.0
        %v257 = vadd.f32 %v220, %v256
        %v258 = vstv %s196
        %v259 = vmul.f32 %v258, %v257
        %v260 = vadd.f32 %v255, %v259
        %v261 = vmul.f32 %v250, %v211
        %262 = vst [vmem:[%s190] sm:$0xff] %v261
        %v263 = vmul.f32 %v260, %v211
        %s264 = scalar_lea.vmem %s190, 8 [#allocation7]
        %265 = vst [vmem:[%s264] sm:$0xff] %v263
        %s266 = scalar_lea.vmem %s190, 16 [#allocation7]
        %267 = vst [vmem:[%s266] sm:$0xff] %v211
        %s268 = sand.u32 %s91, 1
        %s269 = scalar_lea.sflag [#allocation4], %s268
        %s270 = sand.u32 %s91, 1
        %s271 = smul.addr %s270, 24
        %s272 = scalar_lea.vmem [#allocation7], %s271
        // Predicated region
        $region37: #{tpu_custom_call.1} parent=27 // pred_check
          %p273 = pneg %p101
        $region38: #{tpu_custom_call.1} parent=27 // pred_check_branch
          %275 = sbr.rel (%p273) target = $region40
        $region39: #{tpu_custom_call.1} parent=27 // pred_region
          %s277 = ssub.s32 384, 384
          %278 = vsyncadd %s269, %s277
          %s279 = smul.addr %s24, 3
          %s280 = sadd.s32 %s25, %s279
          %s281 = smul.addr %s280, 128
          %s282 = scalar_lea.hbm %s2, %s281
          %s283 = sshll.u32 %s272, 4
          %s284 = int_to_ptr.vmem [resolvable:$true] %s283
          %289 = dma.vmem_to_hbm [thread:$0]  %s284, 384, %s282, %s269, 128, 128, 8
        $region40: #{tpu_custom_call.1} parent=27 // pred_fallthru
          _
      $region28: #{tpu_custom_call.1} parent=5 // pred_fallthru
        _
      %p290 = scmp.le.s32.totalorder 2, %s15
      // Predicated region
      $region41: #{tpu_custom_call.1} parent=5 // pred_check
        %p291 = pneg %p290
      $region42: #{tpu_custom_call.1} parent=5 // pred_check_branch
        %293 = sbr.rel (%p291) target = $region44
      $region43: #{tpu_custom_call.1} parent=5 // pred_region
        %s294 = ssub.s32 %s15, 2
        // Predicated region
        $region45: #{tpu_custom_call.1} parent=43 // pred_check
          %p295 = pneg %p107
        $region46: #{tpu_custom_call.1} parent=43 // pred_check_branch
          %297 = sbr.rel (%p295) target = $region48
        $region47: #{tpu_custom_call.1} parent=43 // pred_region
          %s298 = sand.u32 %s92, 1
          %s299 = scalar_lea.sflag [#allocation4], %s298
          %s300 = sand.u32 %s92, 1
          %s301 = smul.addr %s300, 24
          %s302 = scalar_lea.vmem [#allocation7], %s301
          %303 = dma.done %s299, 384
        $region48: #{tpu_custom_call.1} parent=43 // pred_fallthru
          _
      $region44: #{tpu_custom_call.1} parent=5 // pred_fallthru
        _
    $region6: #{tpu_custom_call.1} parent=1 // loop_footer
      %s19 = sadd.s32 1, %s15
    $region7: #{tpu_custom_call.1} parent=1 // loop_footer_branch
      %14 = sbr.rel target = $region3
    $region8: #{tpu_custom_call.1} parent=1 // loop_exit
      _
    %304 = vsyncpa [#allocation3], 1
    %s305 = scalar_lea.sflag [#allocation3], 1
    %306 = vsyncpa %s305, 1
    %307 = vsyncpa [#allocation4], 1
    %s308 = scalar_lea.sflag [#allocation4], 1
    %309 = vsyncpa %s308, 1
    %310 = vsyncpa [#allocation5], 1
    %s311 = scalar_lea.sflag [#allocation5], 1
    %312 = vsyncpa %s311, 1

</llo_original>
